<compile_context>
chip_gen: v5e
topology: v5e:2x2
jax: 0.10.0
libtpu: 0.0.40
codegen_flags: <defaults>
</compile_context>

<pallas_src>
import functools

import jax
import jax.numpy as jnp
import numpy as np
from jax.experimental import pallas as pl
from jax.experimental.pallas import tpu as pltpu


# ----------------------------------------------------------------------------
# Deterministic parameter init (mirrors torch orthogonal_ + zero bias).
# Weights are stored torch-style [out_features, in_features] because the
# kernel computes W @ X with the batch on the lane axis.
# ----------------------------------------------------------------------------
def orthogonal_init(key, in_dim, out_dim, gain):
    n_rows, n_cols = out_dim, in_dim  # torch weight is [out, in]
    flat = jax.random.normal(key, (max(n_rows, n_cols), min(n_rows, n_cols)),
                             dtype=jnp.float32)
    q, r = jnp.linalg.qr(flat)
    q = q * jnp.sign(jnp.diag(r))          # deterministic sign convention
    if n_rows < n_cols:
        q = q.T
    return gain * q[:n_rows, :n_cols]      # [out, in]


def make_critic_params(key, input_dim, hidden_sizes):
    sizes = [input_dim] + list(hidden_sizes) + [1]
    gains = [float(np.sqrt(2))] * len(hidden_sizes) + [1.0]
    params = []
    for din, dout, g in zip(sizes[:-1], sizes[1:], gains):
        key, sub = jax.random.split(key)
        w = orthogonal_init(sub, din, dout, g)          # [out, in]
        b = jnp.zeros((dout,), jnp.float32)             # zero bias
        params.append((w, b))
    return params


def _round_up(x, m):
    return ((x + m - 1) // m) * m


# ----------------------------------------------------------------------------
# Pallas kernel: full MLP forward for one lane (batch) tile.
#   x_ref  : [D,  tb]   (batch on lanes)
#   w*_ref : [out, in]  (full weights, resident every step)
#   b_ref  : [tot, 1]   (all biases concatenated, 8-row-aligned sections)
#   out_ref: [1,  tb]   (lane-dense value row)
# ----------------------------------------------------------------------------
def _critic_kernel(x_ref, w1_ref, w2_ref, w3_ref, b_ref, out_ref,
                   *, offs, h1, h2, compute_dtype):
    x = x_ref[...]                                       # [D, tb]
    b1 = b_ref[pl.ds(offs[0], h1), :]                    # [h1, 1] (static slice)
    b2 = b_ref[pl.ds(offs[1], h2), :]                    # [h2, 1]
    b3 = b_ref[pl.ds(offs[2], 1), :]                     # [1, 1]

    # Hidden layer 1: W1 @ X + b1, ReLU   (f32 MXU accumulation / elementwise)
    h = jnp.dot(w1_ref[...], x, preferred_element_type=jnp.float32) + b1
    h = jnp.maximum(h, 0.0).astype(compute_dtype)
    # Hidden layer 2: W2 @ h + b2, ReLU
    h = jnp.dot(w2_ref[...], h, preferred_element_type=jnp.float32) + b2
    h = jnp.maximum(h, 0.0).astype(compute_dtype)
    # Output head (Identity activation): W3(1,h2) @ h -> lane-dense [1, tb]
    v = jnp.dot(w3_ref[...], h, preferred_element_type=jnp.float32) + b3
    out_ref[...] = v.astype(out_ref.dtype)


def critic_forward(obs, params, *, batch_tile=4096,
                   compute_dtype=jnp.float32):
    """obs: [B, input_dim] float32 -> value: [B] float32."""
    (w1, b1), (w2, b2), (w3, b3) = params
    B, D = obs.shape
    h1, h2 = w1.shape[0], w2.shape[0]
    assert w3.shape[0] == 1
    assert batch_tile % 128 == 0, "batch_tile must be a multiple of 128"

    # --- Single concatenated bias tensor, each section 8-sublane aligned ---
    offs, tot = [], 0
    for b in (b1, b2, b3):
        offs.append(tot)
        tot += _round_up(b.shape[0], 8)
    bcat = jnp.zeros((tot, 1), jnp.float32)
    for off, b in zip(offs, (b1, b2, b3)):
        bcat = bcat.at[off:off + b.shape[0], 0].set(b.astype(jnp.float32))

    # --- Transposed, lane-dense layout: batch on the 128-lane axis ---------
    # Always pad the batch to a multiple of 128 lanes so stores are unmasked.
    x = obs.T.astype(compute_dtype)                      # [D, B]
    tb = min(batch_tile, _round_up(B, 128))
    Bp = _round_up(B, tb)
    if Bp != B:
        x = jnp.pad(x, ((0, 0), (0, Bp - B)))
    n_tiles = Bp // tb

    w1c = w1.astype(compute_dtype)
    w2c = w2.astype(compute_dtype)
    w3c = w3.astype(compute_dtype)

    kernel = functools.partial(_critic_kernel, offs=tuple(offs), h1=h1, h2=h2,
                               compute_dtype=compute_dtype)

    def full_spec(shape):                                # whole tensor, every step
        return pl.BlockSpec(shape, lambda i: (0, 0))

    out = pl.pallas_call(
        kernel,
        out_shape=jax.ShapeDtypeStruct((1, Bp), jnp.float32),
        grid_spec=pltpu.PrefetchScalarGridSpec(
            num_scalar_prefetch=0,
            grid=(n_tiles,),
            in_specs=[
                pl.BlockSpec((D, tb), lambda i: (0, i)),   # obs tile (lane-dense)
                full_spec(w1c.shape),
                full_spec(w2c.shape),
                full_spec(w3c.shape),
                full_spec(bcat.shape),
            ],
            out_specs=pl.BlockSpec((1, tb), lambda i: (0, i)),
        ),
        compiler_params=pltpu.CompilerParams(
            dimension_semantics=("parallel",)),            # v7x: 2 TCs split tiles
    )(x, w1c, w2c, w3c, bcat)

    return out[0, :B]     # [1, Bp] -> [B]  (matches torch .squeeze(-1))


# ----------------------------------------------------------------------------
# Reference (plain JAX) for sanity checking
# ----------------------------------------------------------------------------
def critic_ref(obs, params):
    h = obs
    for i, (w, b) in enumerate(params):
        h = h @ w.T + b
        if i < len(params) - 1:
            h = jnp.maximum(h, 0.0)
    return h.squeeze(-1)


if __name__ == "__main__":
    key = jax.random.PRNGKey(0)

    input_dim = 16
    hidden_sizes = (32, 32)

    k_param, k_obs1, k_obs2 = jax.random.split(key, 3)
    params = make_critic_params(k_param, input_dim, hidden_sizes)

    # Small batch: single 128-lane tile (batch padded 8 -> 128).
    obs_small = jax.random.normal(k_obs1, (8, input_dim), dtype=jnp.float32)
    v_small = jax.block_until_ready(critic_forward(obs_small, params))
    np.testing.assert_allclose(np.asarray(v_small),
                               np.asarray(critic_ref(obs_small, params)),
                               rtol=1e-5, atol=1e-5)
    assert v_small.shape == (8,)

    # Larger batch with a small tile: exercises the multi-tile "parallel"
    # grid + lane padding (300 -> 3 x 128 tiles).
    obs_big = jax.random.normal(k_obs2, (300, input_dim), dtype=jnp.float32)
    v_big = jax.block_until_ready(
        critic_forward(obs_big, params, batch_tile=128))
    np.testing.assert_allclose(np.asarray(v_big),
                               np.asarray(critic_ref(obs_big, params)),
                               rtol=1e-5, atol=1e-5)
    assert v_big.shape == (300,)

    print("KERNEL_OK")
</pallas_src>

<mosaic_0001>
module attributes {stable_mosaic.version = 11 : i64} {
  func.func @_critic_kernel(%arg0: i32, %arg1: memref<16x128xf32, #tpu.memory_space<vmem>>, %arg2: memref<32x16xf32, #tpu.memory_space<vmem>>, %arg3: memref<32x32xf32, #tpu.memory_space<vmem>>, %arg4: memref<1x32xf32, #tpu.memory_space<vmem>>, %arg5: memref<72x1xf32, #tpu.memory_space<vmem>>, %arg6: memref<1x128xf32, #tpu.memory_space<vmem>>) attributes {dimension_semantics = [#tpu.dimension_semantics<parallel>], iteration_bounds = array<i64: 1>, scalar_prefetch = 0 : i64, scratch_operands = 0 : i64, tpu.core_type = #tpu.core_type<tc>, window_params = [{transform_indices = @transform_0, window_bounds = array<i64: 16, 128>}, {pipeline_mode = #tpu.pipeline_mode<synchronous>, transform_indices = @transform_1, window_bounds = array<i64: 32, 16>}, {pipeline_mode = #tpu.pipeline_mode<synchronous>, transform_indices = @transform_2, window_bounds = array<i64: 32, 32>}, {pipeline_mode = #tpu.pipeline_mode<synchronous>, transform_indices = @transform_3, window_bounds = array<i64: 1, 32>}, {pipeline_mode = #tpu.pipeline_mode<synchronous>, transform_indices = @transform_4, window_bounds = array<i64: 72, 1>}, {transform_indices = @transform_5, window_bounds = array<i64: 1, 128>}]} {
    %c0 = arith.constant 0 : index
    %c0_0 = arith.constant 0 : index
    %0 = vector.load %arg1[%c0, %c0_0] : memref<16x128xf32, #tpu.memory_space<vmem>>, vector<16x128xf32>
    %c0_1 = arith.constant 0 : index
    %c0_2 = arith.constant 0 : index
    %1 = vector.load %arg5[%c0_1, %c0_2] : memref<72x1xf32, #tpu.memory_space<vmem>>, vector<32x1xf32>
    %c32 = arith.constant 32 : index
    %c0_3 = arith.constant 0 : index
    %2 = vector.load %arg5[%c32, %c0_3] : memref<72x1xf32, #tpu.memory_space<vmem>>, vector<32x1xf32>
    %c64 = arith.constant 64 : index
    %c0_4 = arith.constant 0 : index
    %3 = vector.load %arg5[%c64, %c0_4] : memref<72x1xf32, #tpu.memory_space<vmem>>, vector<1x1xf32>
    %c0_5 = arith.constant 0 : index
    %c0_6 = arith.constant 0 : index
    %4 = vector.load %arg2[%c0_5, %c0_6] : memref<32x16xf32, #tpu.memory_space<vmem>>, vector<32x16xf32>
    %cst = arith.constant dense<0.000000e+00> : vector<32x128xf32>
    %5 = tpu.matmul %4, %0, %cst {dimension_numbers = #tpu.dot_dimension_numbers<[1], [0], [0], [1], [0, 0, 1, 1], [], []>} : vector<32x16xf32>, vector<16x128xf32>, vector<32x128xf32> -> vector<32x128xf32>
    %6 = vector.broadcast %1 : vector<32x1xf32> to vector<32x128xf32>
    %7 = arith.addf %5, %6 : vector<32x128xf32>
    %cst_7 = arith.constant 0.000000e+00 : f32
    %8 = vector.broadcast %cst_7 : f32 to vector<32x128xf32>
    %9 = arith.maximumf %7, %8 : vector<32x128xf32>
    %c0_8 = arith.constant 0 : index
    %c0_9 = arith.constant 0 : index
    %10 = vector.load %arg3[%c0_8, %c0_9] : memref<32x32xf32, #tpu.memory_space<vmem>>, vector<32x32xf32>
    %cst_10 = arith.constant dense<0.000000e+00> : vector<32x128xf32>
    %11 = tpu.matmul %10, %9, %cst_10 {dimension_numbers = #tpu.dot_dimension_numbers<[1], [0], [0], [1], [0, 0, 1, 1], [], []>} : vector<32x32xf32>, vector<32x128xf32>, vector<32x128xf32> -> vector<32x128xf32>
    %12 = vector.broadcast %2 : vector<32x1xf32> to vector<32x128xf32>
    %13 = arith.addf %11, %12 : vector<32x128xf32>
    %cst_11 = arith.constant 0.000000e+00 : f32
    %14 = vector.broadcast %cst_11 : f32 to vector<32x128xf32>
    %15 = arith.maximumf %13, %14 : vector<32x128xf32>
    %c0_12 = arith.constant 0 : index
    %c0_13 = arith.constant 0 : index
    %16 = vector.load %arg4[%c0_12, %c0_13] : memref<1x32xf32, #tpu.memory_space<vmem>>, vector<1x32xf32>
    %cst_14 = arith.constant dense<0.000000e+00> : vector<1x128xf32>
    %17 = tpu.matmul %16, %15, %cst_14 {dimension_numbers = #tpu.dot_dimension_numbers<[1], [0], [0], [1], [0, 0, 1, 1], [], []>} : vector<1x32xf32>, vector<32x128xf32>, vector<1x128xf32> -> vector<1x128xf32>
    %18 = vector.broadcast %3 : vector<1x1xf32> to vector<1x128xf32>
    %19 = arith.addf %17, %18 : vector<1x128xf32>
    %c0_15 = arith.constant 0 : index
    %c0_16 = arith.constant 0 : index
    %20 = vector.load %arg6[%c0_15, %c0_16] : memref<1x128xf32, #tpu.memory_space<vmem>>, vector<1x128xf32>
    tpu.vector_store %arg6[%c0_15, %c0_16], %19 {strides = array<i32>} : memref<1x128xf32, #tpu.memory_space<vmem>>, vector<1x128xf32>,
    return
  }
  func.func @transform_0(%arg0: i32) -> (i32, i32) {
    %c0_i32 = arith.constant 0 : i32
    %c0_i32_0 = arith.constant 0 : i32
    return %c0_i32, %arg0 : i32, i32
  }
  func.func @transform_1(%arg0: i32) -> (i32, i32) {
    %c0_i32 = arith.constant 0 : i32
    %c0_i32_0 = arith.constant 0 : i32
    %c0_i32_1 = arith.constant 0 : i32
    return %c0_i32, %c0_i32_0 : i32, i32
  }
  func.func @transform_2(%arg0: i32) -> (i32, i32) {
    %c0_i32 = arith.constant 0 : i32
    %c0_i32_0 = arith.constant 0 : i32
    %c0_i32_1 = arith.constant 0 : i32
    return %c0_i32, %c0_i32_0 : i32, i32
  }
  func.func @transform_3(%arg0: i32) -> (i32, i32) {
    %c0_i32 = arith.constant 0 : i32
    %c0_i32_0 = arith.constant 0 : i32
    %c0_i32_1 = arith.constant 0 : i32
    return %c0_i32, %c0_i32_0 : i32, i32
  }
  func.func @transform_4(%arg0: i32) -> (i32, i32) {
    %c0_i32 = arith.constant 0 : i32
    %c0_i32_0 = arith.constant 0 : i32
    %c0_i32_1 = arith.constant 0 : i32
    return %c0_i32, %c0_i32_0 : i32, i32
  }
  func.func @transform_5(%arg0: i32) -> (i32, i32) {
    %c0_i32 = arith.constant 0 : i32
    %c0_i32_0 = arith.constant 0 : i32
    return %c0_i32, %arg0 : i32, i32
  }
}

</mosaic_0001>

<llo_original>
// kernel: tpu_custom_call.1
$region0: #{tpu_custom_call.1}
  #allocation0 [shape = 'u32[]', space=smem, size = 0x4, offset = 0x4, fixed_abs, tag = 'smem constant byte address 0x4 - core index']
  #allocation1 [shape = 'u32[72,128]{1,0:T(1,128)}', space=vmem, size = 0x9000, scoped, tag = 'internal scratch']
  %s0 = inlined_call_operand.vmem [shape: f32[16,128], index: 0, kind: input, shape index: {}]
  %s1 = inlined_call_operand.vmem [shape: f32[32,16], index: 1, kind: input, shape index: {}]
  %s2 = inlined_call_operand.vmem [shape: f32[32,32], index: 2, kind: input, shape index: {}]
  %s3 = inlined_call_operand.vmem [shape: f32[1,32], index: 3, kind: input, shape index: {}]
  %s4 = inlined_call_operand.vmem [shape: f32[72,1], index: 4, kind: input, shape index: {}]
  %s5 = inlined_call_operand.hbm [shape: f32[1,128], index: 5, kind: output, shape index: {}]
  %s6 = sld [smem:[#allocation0]]
  $region30: #{tpu_custom_call.1} parent=0
    _
  %s8 = ssub.s32 1, %s6
  %s9 = scalar_select 0, %s8, %s6
  $region1: #{tpu_custom_call.1} parent=0
    #allocation2 [shape = 'u8[512]{0}', space=vmem, size = 0x400, scoped, tag = 'output window, operand 0, single buffered']
    #allocation3 [shape = 's32[1]{0}', space=sflag, size = 0x4, scoped, tag = 'scoped memory for tpu_custom_call.1']
    %10 = vsyncpa [#allocation3], 0
    // Predicated region
    $region2: #{tpu_custom_call.1} parent=1 // pred_check
      _
    $region3: #{tpu_custom_call.1} parent=1 // pred_check_branch
      %12 = sbr.rel (0) target = $region5
    $region4: #{tpu_custom_call.1} parent=1 // pred_region
      _
    $region5: #{tpu_custom_call.1} parent=1 // pred_fallthru
      _
    // Predicated region
    $region6: #{tpu_custom_call.1} parent=1 // pred_check
      _
    $region7: #{tpu_custom_call.1} parent=1 // pred_check_branch
      %14 = sbr.rel (0) target = $region9
    $region8: #{tpu_custom_call.1} parent=1 // pred_region
      _
    $region9: #{tpu_custom_call.1} parent=1 // pred_fallthru
      _
    // Predicated region
    $region10: #{tpu_custom_call.1} parent=1 // pred_check
      _
    $region11: #{tpu_custom_call.1} parent=1 // pred_check_branch
      %16 = sbr.rel (0) target = $region13
    $region12: #{tpu_custom_call.1} parent=1 // pred_region
      _
    $region13: #{tpu_custom_call.1} parent=1 // pred_fallthru
      _
    // Predicated region
    $region14: #{tpu_custom_call.1} parent=1 // pred_check
      _
    $region15: #{tpu_custom_call.1} parent=1 // pred_check_branch
      %18 = sbr.rel (0) target = $region17
    $region16: #{tpu_custom_call.1} parent=1 // pred_region
      _
    $region17: #{tpu_custom_call.1} parent=1 // pred_fallthru
      _
    // Predicated region
    $region18: #{tpu_custom_call.1} parent=1 // pred_check
      _
    $region19: #{tpu_custom_call.1} parent=1 // pred_check_branch
      %20 = sbr.rel (0) target = $region21
    $region20: #{tpu_custom_call.1} parent=1 // pred_region
      _
    $region21: #{tpu_custom_call.1} parent=1 // pred_fallthru
      _
    %v21 = vld [vmem:[%s0] sm:$0xff]
    %v22 = vld [vmem:[%s0 + $0x8] sm:$0xff]
    %v23 = vld [vmem:[%s4] sm:$0xff]
    %v24 = vld [vmem:[%s4 + $0x8] sm:$0xff]
    %v25 = vld [vmem:[%s4 + $0x10] sm:$0xff]
    %v26 = vld [vmem:[%s4 + $0x18] sm:$0xff]
    %v27 = vld [vmem:[%s4 + $0x20] sm:$0xff]
    %v28 = vld [vmem:[%s4 + $0x28] sm:$0xff]
    %v29 = vld [vmem:[%s4 + $0x30] sm:$0xff]
    %v30 = vld [vmem:[%s4 + $0x38] sm:$0xff]
    %v31 = vld [vmem:[%s4 + $0x40] sm:$0x1]
    %v32 = vld [vmem:[%s1] sm:$0xff]
    %v33 = vld [vmem:[%s1 + $0x8] sm:$0xff]
    %v34 = vld [vmem:[%s1 + $0x10] sm:$0xff]
    %v35 = vld [vmem:[%s1 + $0x18] sm:$0xff]
    %37 = vset.pattern.permute.xlu0 0
    %38 = vperm.xlu0 %37, %v23
    %v39 = vpop.permute.xlu0 %38
    %42 = vset.pattern.permute.xlu0 0
    %43 = vperm.xlu0 %42, %v24
    %v44 = vpop.permute.xlu0 %43
    %47 = vset.pattern.permute.xlu0 0
    %48 = vperm.xlu0 %47, %v25
    %v49 = vpop.permute.xlu0 %48
    %52 = vset.pattern.permute.xlu0 0
    %53 = vperm.xlu0 %52, %v26
    %v54 = vpop.permute.xlu0 %53
    %vm56 = vcmask 130048
    %v58 = vsel %vm56, %v32, 0
    %v61 = vsel %vm56, %v33, 0
    %v64 = vsel %vm56, %v34, 0
    %v67 = vsel %vm56, %v35, 0
    %69 = vmatpush.msra.mxu0 0.0
    %70 = vmatpush.msra.mxu0 0.0
    %71 = vmatpush.msra.mxu0 0.0
    %72 = vmatpush.msra.mxu0 0.0
    %73 = vmatpush.msra.mxu0 0.0
    %74 = vmatpush.msra.mxu0 0.0
    %75 = vmatpush.msra.mxu0 0.0
    %76 = vmatpush.msra.mxu0 0.0
    %77 = vmatpush.msra.mxu0 0.0
    %78 = vmatpush.msra.mxu0 0.0
    %79 = vmatpush.msra.mxu0 0.0
    %80 = vmatpush.msra.mxu0 0.0
    %81 = vmatpush.msra.mxu0 0.0
    %82 = vmatpush.msra.mxu0 0.0
    %83 = vmatpush.msra.mxu0 %v22
    %84 = vmatpush.msra.mxu0 %v21
    %85 = vmatmul.f32.gmra.mxu0 %v58
    %v86 = vpop.f32.mrf.mxu0
    %v87 = vadd.f32 %v39, %v86
    %88 = vmatmul.f32.gmra.mxu0 %v61
    %v89 = vpop.f32.mrf.mxu0
    %v90 = vadd.f32 %v44, %v89
    %91 = vmatmul.f32.gmra.mxu0 %v64
    %v92 = vpop.f32.mrf.mxu0
    %v93 = vadd.f32 %v49, %v92
    %94 = vmatmul.f32.gmra.mxu0 %v67
    %v95 = vpop.f32.mrf.mxu0
    %v96 = vadd.f32 %v54, %v95
    %97 = vdwg.mxu0
    %v98 = vmax.f32 %v87, 0.0
    %v99 = vmax.f32 %v90, 0.0
    %v100 = vmax.f32 %v93, 0.0
    %v101 = vmax.f32 %v96, 0.0
    %v102 = vld [vmem:[%s2] sm:$0xff]
    %v103 = vld [vmem:[%s2 + $0x8] sm:$0xff]
    %v104 = vld [vmem:[%s2 + $0x10] sm:$0xff]
    %v105 = vld [vmem:[%s2 + $0x18] sm:$0xff]
    %107 = vset.pattern.permute.xlu0 0
    %108 = vperm.xlu0 %107, %v27
    %v109 = vpop.permute.xlu0 %108
    %112 = vset.pattern.permute.xlu0 0
    %113 = vperm.xlu0 %112, %v28
    %v114 = vpop.permute.xlu0 %113
    %117 = vset.pattern.permute.xlu0 0
    %118 = vperm.xlu0 %117, %v29
    %v119 = vpop.permute.xlu0 %118
    %122 = vset.pattern.permute.xlu0 0
    %123 = vperm.xlu0 %122, %v30
    %v124 = vpop.permute.xlu0 %123
    %vm126 = vcmask 261120
    %v128 = vsel %vm126, %v102, 0
    %v131 = vsel %vm126, %v103, 0
    %v134 = vsel %vm126, %v104, 0
    %v137 = vsel %vm126, %v105, 0
    %139 = vmatpush.msra.mxu0 0.0
    %140 = vmatpush.msra.mxu0 0.0
    %141 = vmatpush.msra.mxu0 0.0
    %142 = vmatpush.msra.mxu0 0.0
    %143 = vmatpush.msra.mxu0 0.0
    %144 = vmatpush.msra.mxu0 0.0
    %145 = vmatpush.msra.mxu0 0.0
    %146 = vmatpush.msra.mxu0 0.0
    %147 = vmatpush.msra.mxu0 0.0
    %148 = vmatpush.msra.mxu0 0.0
    %149 = vmatpush.msra.mxu0 0.0
    %150 = vmatpush.msra.mxu0 0.0
    %151 = vmatpush.msra.mxu0 %v101
    %152 = vmatpush.msra.mxu0 %v100
    %153 = vmatpush.msra.mxu0 %v99
    %154 = vmatpush.msra.mxu0 %v98
    %155 = vmatmul.f32.gmra.mxu0 %v128
    %v156 = vpop.f32.mrf.mxu0
    %v157 = vadd.f32 %v109, %v156
    %158 = vmatmul.f32.gmra.mxu0 %v131
    %v159 = vpop.f32.mrf.mxu0
    %v160 = vadd.f32 %v114, %v159
    %161 = vmatmul.f32.gmra.mxu0 %v134
    %v162 = vpop.f32.mrf.mxu0
    %v163 = vadd.f32 %v119, %v162
    %164 = vmatmul.f32.gmra.mxu0 %v137
    %v165 = vpop.f32.mrf.mxu0
    %v166 = vadd.f32 %v124, %v165
    %167 = vdwg.mxu0
    %v168 = vmax.f32 %v157, 0.0
    %v169 = vmax.f32 %v160, 0.0
    %v170 = vmax.f32 %v163, 0.0
    %v171 = vmax.f32 %v166, 0.0
    %v172 = vld [vmem:[%s3] sm:$0x1]
    %174 = vset.pattern.permute.xlu0 0
    %175 = vperm.xlu0 %174, %v31
    %v176 = vpop.permute.xlu0 %175
    %v179 = vsel %vm126, %v172, 0
    %181 = vmatpush.msra.mxu0 0.0
    %182 = vmatpush.msra.mxu0 0.0
    %183 = vmatpush.msra.mxu0 0.0
    %184 = vmatpush.msra.mxu0 0.0
    %185 = vmatpush.msra.mxu0 0.0
    %186 = vmatpush.msra.mxu0 0.0
    %187 = vmatpush.msra.mxu0 0.0
    %188 = vmatpush.msra.mxu0 0.0
    %189 = vmatpush.msra.mxu0 0.0
    %190 = vmatpush.msra.mxu0 0.0
    %191 = vmatpush.msra.mxu0 0.0
    %192 = vmatpush.msra.mxu0 0.0
    %193 = vmatpush.msra.mxu0 %v171
    %194 = vmatpush.msra.mxu0 %v170
    %195 = vmatpush.msra.mxu0 %v169
    %196 = vmatpush.msra.mxu0 %v168
    %197 = vmatmul.f32.gmra.mxu0 %v179
    %v198 = vpop.f32.mrf.mxu0
    %v199 = vadd.f32 %v176, %v198
    %200 = vdwg.mxu0
    %201 = vst [vmem:[#allocation2] sm:$0x1] %v199
    // Predicated region
    $region22: #{tpu_custom_call.1} parent=1 // pred_check
      _
    $region23: #{tpu_custom_call.1} parent=1 // pred_check_branch
      %203 = sbr.rel (0) target = $region25
    $region24: #{tpu_custom_call.1} parent=1 // pred_region
      %205 = vsyncadd [#allocation3], 0
      %s207 = sshll.u32 [#allocation2], 4
      %s208 = int_to_ptr.vmem [resolvable:$true] %s207
      %s209 = sshll.u32 %s5, 4
      %s210 = int_to_ptr.hbm [resolvable:$true] %s209
      %212 = dma.vmem_to_hbm [thread:$0]  %s208, 16, %s210, [#allocation3]
    $region25: #{tpu_custom_call.1} parent=1 // pred_fallthru
      _
    // Predicated region
    $region26: #{tpu_custom_call.1} parent=1 // pred_check
      _
    $region27: #{tpu_custom_call.1} parent=1 // pred_check_branch
      %214 = sbr.rel (0) target = $region29
    $region28: #{tpu_custom_call.1} parent=1 // pred_region
      %216 = dma.done [#allocation3], 16
    $region29: #{tpu_custom_call.1} parent=1 // pred_fallthru
      _
    %217 = vsyncpa [#allocation3], 1

</llo_original>
